<compile_context>
chip_gen: v5e
topology: v5e:2x2
jax: 0.10.0
libtpu: 0.0.40
codegen_flags: <defaults>
</compile_context>

<pallas_src>
import math

import jax
import jax.numpy as jnp
from jax.experimental import pallas as pl
from jax.experimental.pallas import tpu as pltpu


def _round_up(x, m):
    return ((x + m - 1) // m) * m


def _pick_tile(padded_dim, granule, cap):
    """Largest multiple of `granule` that divides `padded_dim` and is <= cap."""
    q = padded_dim // granule
    dmax = max(min(q, cap // granule), 1)
    for d in range(dmax, 0, -1):
        if q % d == 0:
            return d * granule
    return granule


def _linear_no_rho_kernel(u_ref, s_ref, w_ref, bm_ref, bs2_ref,
                          out_u_ref, out_s_ref, acc_u, acc_s):
    k = pl.program_id(2)

    u = u_ref[...]                     # (tm, tk) bf16
    s = s_ref[...]                     # (tm, tk) bf16
    w = w_ref[...]                     # (tk, tn) bf16  (pre-transposed [K, N])

    # Squares on the VPU in bf16; MXU takes bf16 with f32 accumulation.
    s2 = s * s
    w2 = w * w

    du = jnp.dot(u, w, preferred_element_type=jnp.float32)     # (tm, tn) f32
    ds = jnp.dot(s2, w2, preferred_element_type=jnp.float32)   # (tm, tn) f32

    @pl.when(k == 0)
    def _():
        acc_u[...] = du
        acc_s[...] = ds

    @pl.when(k > 0)
    def _():
        acc_u[...] += du
        acc_s[...] += ds

    @pl.when(k == pl.num_programs(2) - 1)
    def _():
        out_u_ref[...] = (acc_u[...] + bm_ref[...]).astype(out_u_ref.dtype)
        out_s_ref[...] = jnp.sqrt(acc_s[...] + bs2_ref[...]).astype(out_s_ref.dtype)


def linear_no_rho(u, s, weight, bias_mean=None, bias_std=None,
                  *, tm=None, tn=None, tk=None):
    """u, s: [B, K]. weight: [N, K]. bias_*: [N] or None.

    Returns (out_u, out_s), each [B, N] float32.
    """
    B, K = u.shape
    N, K2 = weight.shape
    assert K == K2 and s.shape == u.shape

    # Pad to hardware granules only (not full tiles): B -> 16 (bf16 sublane
    # packing), K/N -> 128 (lanes).
    Bp = _round_up(max(B, 1), 16)
    Kp = _round_up(max(K, 1), 128)
    Np = _round_up(max(N, 1), 128)

    # Tiles: divisors of the padded extents so no extra FLOPs are padded in.
    if tm is None:
        tm = _pick_tile(Bp, 16, 512)
    if tn is None:
        tn = _pick_tile(Np, 128, 256)
    if tk is None:
        tk = _pick_tile(Kp, 128, 1024)

    # v7x has 2 TensorCores; make sure the parallel (M, N) grid has >= 2
    # blocks when possible so both cores get work.
    if (Bp // tm) * (Np // tn) < 2 and Np // 128 >= 2:
        half_cap = (Np // 2) // 128 * 128
        if half_cap >= 128:
            tn = _pick_tile(Np, 128, half_cap)

    assert Bp % tm == 0 and Np % tn == 0 and Kp % tk == 0, (
        f"tiles must divide padded dims: ({Bp},{Np},{Kp}) vs ({tm},{tn},{tk})")

    def pad2(x, rows, cols):
        r, c = x.shape
        if (r, c) == (rows, cols):
            return x
        return jnp.pad(x, ((0, rows - r), (0, cols - c)))

    # Stream operands as bf16 (halves W HBM traffic; MXU saw bf16 anyway).
    u_p = pad2(u.astype(jnp.bfloat16), Bp, Kp)
    s_p = pad2(s.astype(jnp.bfloat16), Bp, Kp)
    # One-time host-side transpose of the (static, reused) weight to [K, N].
    w_p = pad2(weight.astype(jnp.bfloat16).T, Kp, Np)

    bm = (jnp.zeros((N,), jnp.float32) if bias_mean is None
          else bias_mean.astype(jnp.float32))
    bs2 = (jnp.zeros((N,), jnp.float32) if bias_std is None
           else jnp.square(bias_std.astype(jnp.float32)))
    bm_p = pad2(bm.reshape(1, N), 1, Np)
    bs2_p = pad2(bs2.reshape(1, N), 1, Np)

    grid = (Bp // tm, Np // tn, Kp // tk)

    flops = 2 * 2 * Bp * Kp * Np                       # two matmuls
    bytes_accessed = (2 * (2 * Bp * Kp + Np * Kp)      # bf16 inputs
                      + 4 * (2 * Bp * Np + 2 * Np))    # f32 outputs + bias rows

    # VMEM footprint: double-buffered inputs/outputs + persistent accumulators.
    tile_bytes = (2 * (tm * tk * 2)          # u
                  + 2 * (tm * tk * 2)        # s
                  + 2 * (tk * tn * 2)        # w
                  + 2 * 2 * (tn * 4)         # bias rows
                  + 2 * 2 * (tm * tn * 4)    # two f32 outputs
                  + 2 * (tm * tn * 4))       # two f32 accumulators
    vmem_limit = min(int(tile_bytes * 1.5) + (2 << 20), 32 * 1024 * 1024)

    out_u, out_s = pl.pallas_call(
        _linear_no_rho_kernel,
        out_shape=(jax.ShapeDtypeStruct((Bp, Np), jnp.float32),
                   jax.ShapeDtypeStruct((Bp, Np), jnp.float32)),
        grid_spec=pltpu.PrefetchScalarGridSpec(
            num_scalar_prefetch=0,
            grid=grid,
            in_specs=[
                pl.BlockSpec((tm, tk), lambda i, j, k: (i, k)),   # u
                pl.BlockSpec((tm, tk), lambda i, j, k: (i, k)),   # s
                pl.BlockSpec((tk, tn), lambda i, j, k: (k, j)),   # W^T ([K, N])
                pl.BlockSpec((1, tn), lambda i, j, k: (0, j)),    # bias_mean row
                pl.BlockSpec((1, tn), lambda i, j, k: (0, j)),    # bias_std**2 row
            ],
            out_specs=[
                pl.BlockSpec((tm, tn), lambda i, j, k: (i, j)),   # out_u
                pl.BlockSpec((tm, tn), lambda i, j, k: (i, j)),   # out_s
            ],
            scratch_shapes=[pltpu.VMEM((tm, tn), jnp.float32),
                            pltpu.VMEM((tm, tn), jnp.float32)],
        ),
        compiler_params=pltpu.CompilerParams(
            dimension_semantics=("parallel", "parallel", "arbitrary"),
            vmem_limit_bytes=vmem_limit,
        ),
        cost_estimate=pl.CostEstimate(flops=flops,
                                      transcendentals=Bp * Np,
                                      bytes_accessed=bytes_accessed),
    )(u_p, s_p, w_p, bm_p, bs2_p)

    return out_u[:B, :N], out_s[:B, :N]


def init_params(key, in_features, out_features, bias_mean=True, bias_std=True):
    """Deterministic init mirroring the PyTorch reset_parameters()."""
    kw, kbm, kbs = jax.random.split(key, 3)
    # kaiming_uniform_(a=sqrt(5)) on (out, in) -> bound = 1/sqrt(fan_in)
    bound = 1.0 / math.sqrt(in_features)
    weight = jax.random.uniform(kw, (out_features, in_features),
                                jnp.float32, -bound, bound)
    bm = (jax.random.uniform(kbm, (out_features,), jnp.float32, -bound, bound)
          if bias_mean else None)
    bs = (jax.random.uniform(kbs, (out_features,), jnp.float32, 0.0, bound)
          if bias_std else None)
    return weight, bm, bs


if __name__ == "__main__":
    # Small shapes, but big enough to exercise N-tiling, K-accumulation and padding.
    B, K, N = 16, 256, 384
    key = jax.random.PRNGKey(0)
    ku, ks, kp = jax.random.split(key, 3)

    u = jax.random.normal(ku, (B, K), jnp.float32)
    s = jnp.abs(jax.random.normal(ks, (B, K), jnp.float32))   # std inputs >= 0

    weight, bias_mean, bias_std = init_params(kp, K, N,
                                              bias_mean=True, bias_std=True)

    # Explicit small tiles -> (1, 3, 2) grid: exercises K accumulation + N tiling.
    out_u, out_s = linear_no_rho(u, s, weight, bias_mean, bias_std,
                                 tm=16, tn=128, tk=128)
    # Default tile selection path (single K step, 3 N blocks).
    out_u2, out_s2 = linear_no_rho(u, s, weight, bias_mean, bias_std)
    jax.block_until_ready((out_u, out_s, out_u2, out_s2))

    # Reference with the same bf16 input quantization (+ bf16 squares) and f32 acc.
    bf = jnp.bfloat16
    hi = jax.lax.Precision.HIGHEST
    u_b = u.astype(bf).astype(jnp.float32)
    w_b = weight.astype(bf)
    s_b = s.astype(bf)
    s2_b = (s_b * s_b).astype(jnp.float32)
    w2_b = (w_b * w_b).astype(jnp.float32)
    ref_u = jnp.dot(u_b, w_b.astype(jnp.float32).T, precision=hi) + bias_mean
    ref_s = jnp.sqrt(jnp.dot(s2_b, w2_b.T, precision=hi) + bias_std ** 2)
    for ou, os_ in ((out_u, out_s), (out_u2, out_s2)):
        assert jnp.allclose(ou, ref_u, atol=2e-3, rtol=2e-3), "mean path mismatch"
        assert jnp.allclose(os_, ref_s, atol=2e-3, rtol=2e-3), "std path mismatch"

    # Loose sanity check against the exact f32 reference (bf16 MXU rounding).
    # TODO(synk): expose an f32-operand mode if callers need exact f32-linear fidelity.
    ref_u_f32 = u @ weight.T + bias_mean
    ref_s_f32 = jnp.sqrt((s ** 2) @ (weight ** 2).T + bias_std ** 2)
    assert jnp.allclose(out_u, ref_u_f32, atol=5e-2, rtol=5e-2)
    assert jnp.allclose(out_s, ref_s_f32, atol=5e-2, rtol=5e-2)

    print("KERNEL_OK")
</pallas_src>

<mosaic_0001>
module attributes {stable_mosaic.version = 11 : i64} {
  func.func @_linear_no_rho_kernel(%arg0: i32, %arg1: i32, %arg2: i32, %arg3: memref<16x128xbf16, #tpu.memory_space<vmem>>, %arg4: memref<16x128xbf16, #tpu.memory_space<vmem>>, %arg5: memref<128x128xbf16, #tpu.memory_space<vmem>>, %arg6: memref<1x128xf32, #tpu.memory_space<vmem>>, %arg7: memref<1x128xf32, #tpu.memory_space<vmem>>, %arg8: memref<16x128xf32, #tpu.memory_space<vmem>>, %arg9: memref<16x128xf32, #tpu.memory_space<vmem>>, %arg10: memref<16x128xf32, #tpu.memory_space<vmem>>, %arg11: memref<16x128xf32, #tpu.memory_space<vmem>>) attributes {dimension_semantics = [#tpu.dimension_semantics<parallel>, #tpu.dimension_semantics<parallel>, #tpu.dimension_semantics<arbitrary>], iteration_bounds = array<i64: 1, 3, 2>, scalar_prefetch = 0 : i64, scratch_operands = 2 : i64, tpu.core_type = #tpu.core_type<tc>, window_params = [{transform_indices = @transform_0, window_bounds = array<i64: 16, 128>}, {transform_indices = @transform_1, window_bounds = array<i64: 16, 128>}, {transform_indices = @transform_2, window_bounds = array<i64: 128, 128>}, {transform_indices = @transform_3, window_bounds = array<i64: 1, 128>}, {transform_indices = @transform_4, window_bounds = array<i64: 1, 128>}, {transform_indices = @transform_5, window_bounds = array<i64: 16, 128>}, {transform_indices = @transform_6, window_bounds = array<i64: 16, 128>}]} {
    %c0 = arith.constant 0 : index
    %c0_0 = arith.constant 0 : index
    %0 = vector.load %arg3[%c0, %c0_0] : memref<16x128xbf16, #tpu.memory_space<vmem>>, vector<16x128xbf16>
    %c0_1 = arith.constant 0 : index
    %c0_2 = arith.constant 0 : index
    %1 = vector.load %arg4[%c0_1, %c0_2] : memref<16x128xbf16, #tpu.memory_space<vmem>>, vector<16x128xbf16>
    %c0_3 = arith.constant 0 : index
    %c0_4 = arith.constant 0 : index
    %2 = vector.load %arg5[%c0_3, %c0_4] : memref<128x128xbf16, #tpu.memory_space<vmem>>, vector<128x128xbf16>
    %3 = arith.mulf %1, %1 : vector<16x128xbf16>
    %4 = arith.mulf %2, %2 : vector<128x128xbf16>
    %cst = arith.constant dense<0.000000e+00> : vector<16x128xf32>
    %5 = tpu.matmul %0, %2, %cst {dimension_numbers = #tpu.dot_dimension_numbers<[1], [0], [0], [1], [0, 0, 1, 1], [], []>} : vector<16x128xbf16>, vector<128x128xbf16>, vector<16x128xf32> -> vector<16x128xf32>
    %cst_5 = arith.constant dense<0.000000e+00> : vector<16x128xf32>
    %6 = tpu.matmul %3, %4, %cst_5 {dimension_numbers = #tpu.dot_dimension_numbers<[1], [0], [0], [1], [0, 0, 1, 1], [], []>} : vector<16x128xbf16>, vector<128x128xbf16>, vector<16x128xf32> -> vector<16x128xf32>
    %c0_i32 = arith.constant 0 : i32
    %7 = arith.cmpi eq, %arg2, %c0_i32 : i32
    %8 = arith.extui %7 : i1 to i32
    %c0_i32_6 = arith.constant 0 : i32
    %9 = arith.cmpi ne, %8, %c0_i32_6 : i32
    scf.if %9 {
      %c0_10 = arith.constant 0 : index
      %c0_11 = arith.constant 0 : index
      %16 = vector.load %arg10[%c0_10, %c0_11] : memref<16x128xf32, #tpu.memory_space<vmem>>, vector<16x128xf32>
      tpu.vector_store %arg10[%c0_10, %c0_11], %5 {strides = array<i32>} : memref<16x128xf32, #tpu.memory_space<vmem>>, vector<16x128xf32>,
      %c0_12 = arith.constant 0 : index
      %c0_13 = arith.constant 0 : index
      %17 = vector.load %arg11[%c0_12, %c0_13] : memref<16x128xf32, #tpu.memory_space<vmem>>, vector<16x128xf32>
      tpu.vector_store %arg11[%c0_12, %c0_13], %6 {strides = array<i32>} : memref<16x128xf32, #tpu.memory_space<vmem>>, vector<16x128xf32>,
    } else {
    }
    %c0_i32_7 = arith.constant 0 : i32
    %10 = arith.cmpi sgt, %arg2, %c0_i32_7 : i32
    %11 = arith.extui %10 : i1 to i32
    %c0_i32_8 = arith.constant 0 : i32
    %12 = arith.cmpi ne, %11, %c0_i32_8 : i32
    scf.if %12 {
      %c0_10 = arith.constant 0 : index
      %c0_11 = arith.constant 0 : index
      %16 = vector.load %arg10[%c0_10, %c0_11] : memref<16x128xf32, #tpu.memory_space<vmem>>, vector<16x128xf32>
      %17 = arith.addf %16, %5 : vector<16x128xf32>
      %c0_12 = arith.constant 0 : index
      %c0_13 = arith.constant 0 : index
      %18 = vector.load %arg10[%c0_12, %c0_13] : memref<16x128xf32, #tpu.memory_space<vmem>>, vector<16x128xf32>
      tpu.vector_store %arg10[%c0_12, %c0_13], %17 {strides = array<i32>} : memref<16x128xf32, #tpu.memory_space<vmem>>, vector<16x128xf32>,
      %c0_14 = arith.constant 0 : index
      %c0_15 = arith.constant 0 : index
      %19 = vector.load %arg11[%c0_14, %c0_15] : memref<16x128xf32, #tpu.memory_space<vmem>>, vector<16x128xf32>
      %20 = arith.addf %19, %6 : vector<16x128xf32>
      %c0_16 = arith.constant 0 : index
      %c0_17 = arith.constant 0 : index
      %21 = vector.load %arg11[%c0_16, %c0_17] : memref<16x128xf32, #tpu.memory_space<vmem>>, vector<16x128xf32>
      tpu.vector_store %arg11[%c0_16, %c0_17], %20 {strides = array<i32>} : memref<16x128xf32, #tpu.memory_space<vmem>>, vector<16x128xf32>,
    } else {
    }
    %c1_i32 = arith.constant 1 : i32
    %13 = arith.cmpi eq, %arg2, %c1_i32 : i32
    %14 = arith.extui %13 : i1 to i32
    %c0_i32_9 = arith.constant 0 : i32
    %15 = arith.cmpi ne, %14, %c0_i32_9 : i32
    scf.if %15 {
      %c0_10 = arith.constant 0 : index
      %c0_11 = arith.constant 0 : index
      %16 = vector.load %arg10[%c0_10, %c0_11] : memref<16x128xf32, #tpu.memory_space<vmem>>, vector<16x128xf32>
      %c0_12 = arith.constant 0 : index
      %c0_13 = arith.constant 0 : index
      %17 = vector.load %arg6[%c0_12, %c0_13] : memref<1x128xf32, #tpu.memory_space<vmem>>, vector<1x128xf32>
      %18 = vector.broadcast %17 : vector<1x128xf32> to vector<16x128xf32>
      %19 = arith.addf %16, %18 : vector<16x128xf32>
      %c0_14 = arith.constant 0 : index
      %c0_15 = arith.constant 0 : index
      %20 = vector.load %arg8[%c0_14, %c0_15] : memref<16x128xf32, #tpu.memory_space<vmem>>, vector<16x128xf32>
      tpu.vector_store %arg8[%c0_14, %c0_15], %19 {strides = array<i32>} : memref<16x128xf32, #tpu.memory_space<vmem>>, vector<16x128xf32>,
      %c0_16 = arith.constant 0 : index
      %c0_17 = arith.constant 0 : index
      %21 = vector.load %arg11[%c0_16, %c0_17] : memref<16x128xf32, #tpu.memory_space<vmem>>, vector<16x128xf32>
      %c0_18 = arith.constant 0 : index
      %c0_19 = arith.constant 0 : index
      %22 = vector.load %arg7[%c0_18, %c0_19] : memref<1x128xf32, #tpu.memory_space<vmem>>, vector<1x128xf32>
      %23 = vector.broadcast %22 : vector<1x128xf32> to vector<16x128xf32>
      %24 = arith.addf %21, %23 : vector<16x128xf32>
      %25 = math.sqrt %24 : vector<16x128xf32>
      %c0_20 = arith.constant 0 : index
      %c0_21 = arith.constant 0 : index
      %26 = vector.load %arg9[%c0_20, %c0_21] : memref<16x128xf32, #tpu.memory_space<vmem>>, vector<16x128xf32>
      tpu.vector_store %arg9[%c0_20, %c0_21], %25 {strides = array<i32>} : memref<16x128xf32, #tpu.memory_space<vmem>>, vector<16x128xf32>,
    } else {
    }
    return
  }
  func.func @transform_0(%arg0: i32, %arg1: i32, %arg2: i32) -> (i32, i32) {
    %c0_i32 = arith.constant 0 : i32
    return %arg0, %arg2 : i32, i32
  }
  func.func @transform_1(%arg0: i32, %arg1: i32, %arg2: i32) -> (i32, i32) {
    %c0_i32 = arith.constant 0 : i32
    return %arg0, %arg2 : i32, i32
  }
  func.func @transform_2(%arg0: i32, %arg1: i32, %arg2: i32) -> (i32, i32) {
    %c0_i32 = arith.constant 0 : i32
    return %arg2, %arg1 : i32, i32
  }
  func.func @transform_3(%arg0: i32, %arg1: i32, %arg2: i32) -> (i32, i32) {
    %c0_i32 = arith.constant 0 : i32
    %c0_i32_0 = arith.constant 0 : i32
    return %c0_i32, %arg1 : i32, i32
  }
  func.func @transform_4(%arg0: i32, %arg1: i32, %arg2: i32) -> (i32, i32) {
    %c0_i32 = arith.constant 0 : i32
    %c0_i32_0 = arith.constant 0 : i32
    return %c0_i32, %arg1 : i32, i32
  }
  func.func @transform_5(%arg0: i32, %arg1: i32, %arg2: i32) -> (i32, i32) {
    %c0_i32 = arith.constant 0 : i32
    return %arg0, %arg1 : i32, i32
  }
  func.func @transform_6(%arg0: i32, %arg1: i32, %arg2: i32) -> (i32, i32) {
    %c0_i32 = arith.constant 0 : i32
    return %arg0, %arg1 : i32, i32
  }
}

</mosaic_0001>

<llo_original>
// kernel: tpu_custom_call.1
$region0: #{tpu_custom_call.1}
  #allocation0 [shape = 'u32[]', space=smem, size = 0x4, offset = 0x4, fixed_abs, tag = 'smem constant byte address 0x4 - core index']
  #allocation1 [shape = 'u32[72,128]{1,0:T(1,128)}', space=vmem, size = 0x9000, scoped, tag = 'internal scratch']
  #allocation2 [shape = 'f32[16,128]{1,0:T(8,128)}', space=vmem, size = 0x2000, scoped, tag = 'scratch operand']
  #allocation3 [shape = 'f32[16,128]{1,0:T(8,128)}', space=vmem, size = 0x2000, scoped, tag = 'scratch operand']
  %s0 = inlined_call_operand.hbm [shape: bf16[16,256], index: 0, kind: input, shape index: {}]
  %s1 = inlined_call_operand.hbm [shape: bf16[16,256], index: 1, kind: input, shape index: {}]
  %s2 = inlined_call_operand.hbm [shape: bf16[256,384], index: 2, kind: input, shape index: {}]
  %s3 = inlined_call_operand.hbm [shape: f32[1,384], index: 3, kind: input, shape index: {}]
  %s4 = inlined_call_operand.vmem [shape: f32[1,384], index: 4, kind: input, shape index: {}]
  %s5 = inlined_call_operand.hbm [shape: f32[16,384], index: 5, kind: output, shape index: {0}]
  %s6 = inlined_call_operand.hbm [shape: f32[16,384], index: 6, kind: output, shape index: {1}]
  %7 = xla_tuple %s5, %s6
  %s8 = sld [smem:[#allocation0]]
  $region89: #{tpu_custom_call.1} parent=0
    _
  %s10 = ssub.s32 1, %s8
  %s11 = scalar_select 0, %s10, %s8
  $region1: #{tpu_custom_call.1} parent=0
    #allocation4 [shape = 'u8[8192]{0}', space=vmem, size = 0x2000, scoped, tag = 'input window, operand 0']
    #allocation5 [shape = 's32[2]{0}', space=sflag, size = 0x8, scoped, tag = 'scoped memory for tpu_custom_call.1']
    #allocation6 [shape = 's32[2]{0}', space=sflag, size = 0x8, scoped, tag = 'scoped memory for tpu_custom_call.1']
    #allocation7 [shape = 'u8[8192]{0}', space=vmem, size = 0x2000, scoped, tag = 'input window, operand 1']
    #allocation8 [shape = 's32[2]{0}', space=sflag, size = 0x8, scoped, tag = 'scoped memory for tpu_custom_call.1']
    #allocation9 [shape = 'u8[65536]{0}', space=vmem, size = 0x10000, scoped, tag = 'input window, operand 2']
    #allocation10 [shape = 'u8[1024]{0}', space=vmem, size = 0x400, scoped, tag = 'input window, operand 3']
    #allocation11 [shape = 's32[2]{0}', space=sflag, size = 0x8, scoped, tag = 'scoped memory for tpu_custom_call.1']
    #allocation12 [shape = 'u8[16384]{0}', space=vmem, size = 0x4000, scoped, tag = 'output window, operand 0']
    #allocation13 [shape = 'u8[16384]{0}', space=vmem, size = 0x4000, scoped, tag = 'output window, operand 1']
    #allocation14 [shape = 's32[2]{0}', space=sflag, size = 0x8, scoped, tag = 'scoped memory for tpu_custom_call.1']
    %12 = vsyncpa [#allocation5], 0
    %s13 = scalar_lea.sflag [#allocation5], 1
    %14 = vsyncpa %s13, 0
    %15 = vsyncpa [#allocation8], 0
    %s16 = scalar_lea.sflag [#allocation8], 1
    %17 = vsyncpa %s16, 0
    %18 = vsyncpa [#allocation11], 0
    %s19 = scalar_lea.sflag [#allocation11], 1
    %20 = vsyncpa %s19, 0
    %21 = vsyncpa [#allocation6], 0
    %s22 = scalar_lea.sflag [#allocation6], 1
    %23 = vsyncpa %s22, 0
    %24 = vsyncpa [#allocation14], 0
    %s25 = scalar_lea.sflag [#allocation14], 1
    %26 = vsyncpa %s25, 0
    loop: start=0, step=1, limit=8
    $region2: #{tpu_custom_call.1} parent=1 // loop_pre_header
      _
    $region3: #{tpu_custom_call.1} parent=1 // loop_header
      %s28 = sphi 0, %s32
      %p29 = scmp.ge.s32.totalorder %s28, 8
      %s35 = sphi 0, %s54
      %s36 = sphi 0, %s50
      %s37 = sphi 0, %s46
      %s38 = sphi 0, %s35
      %s39 = sphi 0, %s36
      %s40 = sphi 0, %s37
      %s41 = sphi 0, %s38
      %s42 = sphi 0, %s39
      %s43 = sphi 0, %s40
      %s59 = sphi 0, %s61
      %s62 = sphi 0, %s59
      %s63 = sphi 0, %s62
      %s79 = sphi 0, %s63
      %s87 = sphi 0, %s89
      %s90 = sphi 0, %s87
      %s91 = sphi 0, %s90
      %s107 = sphi 0, %s91
      %s115 = sphi 0, %s117
      %s118 = sphi 0, %s115
      %s119 = sphi 0, %s118
      %s135 = sphi 0, %s119
      %s141 = sphi 0, %s143
      %s144 = sphi 0, %s141
      %s145 = sphi 0, %s144
      %s161 = sphi 0, %s145
      %s167 = sphi 0, %s169
      %s170 = sphi 0, %s167
      %s171 = sphi 0, %s170
      %s187 = sphi 0, %s171
      %s195 = sphi 0, %s197
      %s198 = sphi 0, %s195
      %s199 = sphi 0, %s198
      %s215 = sphi 0, %s199
      %s223 = sphi 0, %s225
      %s226 = sphi 0, %s223
      %s227 = sphi 0, %s226
      %s243 = sphi 0, %s227
    $region4: #{tpu_custom_call.1} parent=1 // loop_header_branch
      %31 = sbr.rel (%p29) target = $region8
    $region5: #{tpu_custom_call.1} parent=1 // loop_body
      %s33 = ssub.s32 %s28, 1
      %s34 = ssub.s32 %s28, 2
      %s44 = sadd.s32 1, %s37
      %p45 = scmp.ge.s32.totalorder %s44, 2
      %s46 = scalar_select %p45, 0, %s44
      %s47 = sadd.s32 1, %s36
      %s48 = scalar_select %p45, %s47, %s36
      %p49 = scmp.ge.s32.totalorder %s48, 3
      %s50 = scalar_select %p49, 0, %s48
      %s51 = sadd.s32 1, %s35
      %s52 = scalar_select %p49, %s51, %s35
      %p53 = scmp.ge.s32.totalorder %s52, 1
      %s54 = scalar_select %p53, 0, %s52
      %s55 = ssub.s32 %s35, %s54
      %s56 = ssub.s32 %s37, %s46
      %s57 = sor.u32 %s55, %s56
      %p58 = scmp.eq.s32.totalorder %s57, 0
      %s60 = sadd.s32 %s59, 1
      %s61 = scalar_select %p58, %s59, %s60
      %p64 = pneg %p58
      %p65 = scmp.eq.s32.totalorder %s28, 5
      %p66 = por %p64, %p65
      %p67 = scmp.ne.s32.totalorder %s59, %s62
      %p68 = scmp.eq.s32.totalorder %s28, 0
      %p69 = por %p67, %p68
      %p70 = scmp.ne.s32.totalorder %s59, %s62
      %p71 = scmp.eq.s32.totalorder %s33, 5
      %p72 = por %p70, %p71
      %p73 = scmp.ne.s32.totalorder %s62, %s63
      %p74 = scmp.eq.s32.totalorder %s33, 0
      %p75 = por %p73, %p74
      %p76 = scmp.ne.s32.totalorder %s62, %s63
      %p77 = scmp.eq.s32.totalorder %s34, 5
      %p78 = por %p76, %p77
      %p80 = scmp.ne.s32.totalorder %s63, %s79
      %p81 = scmp.eq.s32.totalorder %s34, 0
      %p82 = por %p80, %p81
      %s83 = ssub.s32 %s35, %s54
      %s84 = ssub.s32 %s37, %s46
      %s85 = sor.u32 %s83, %s84
      %p86 = scmp.eq.s32.totalorder %s85, 0
      %s88 = sadd.s32 %s87, 1
      %s89 = scalar_select %p86, %s87, %s88
      %p92 = pneg %p86
      %p93 = scmp.eq.s32.totalorder %s28, 5
      %p94 = por %p92, %p93
      %p95 = scmp.ne.s32.totalorder %s87, %s90
      %p96 = scmp.eq.s32.totalorder %s28, 0
      %p97 = por %p95, %p96
      %p98 = scmp.ne.s32.totalorder %s87, %s90
      %p99 = scmp.eq.s32.totalorder %s33, 5
      %p100 = por %p98, %p99
      %p101 = scmp.ne.s32.totalorder %s90, %s91
      %p102 = scmp.eq.s32.totalorder %s33, 0
      %p103 = por %p101, %p102
      %p104 = scmp.ne.s32.totalorder %s90, %s91
      %p105 = scmp.eq.s32.totalorder %s34, 5
      %p106 = por %p104, %p105
      %p108 = scmp.ne.s32.totalorder %s91, %s107
      %p109 = scmp.eq.s32.totalorder %s34, 0
      %p110 = por %p108, %p109
      %s111 = ssub.s32 %s37, %s46
      %s112 = ssub.s32 %s36, %s50
      %s113 = sor.u32 %s111, %s112
      %p114 = scmp.eq.s32.totalorder %s113, 0
      %s116 = sadd.s32 %s115, 1
      %s117 = scalar_select %p114, %s115, %s116
      %p120 = pneg %p114
      %p121 = scmp.eq.s32.totalorder %s28, 5
      %p122 = por %p120, %p121
      %p123 = scmp.ne.s32.totalorder %s115, %s118
      %p124 = scmp.eq.s32.totalorder %s28, 0
      %p125 = por %p123, %p124
      %p126 = scmp.ne.s32.totalorder %s115, %s118
      %p127 = scmp.eq.s32.totalorder %s33, 5
      %p128 = por %p126, %p127
      %p129 = scmp.ne.s32.totalorder %s118, %s119
      %p130 = scmp.eq.s32.totalorder %s33, 0
      %p131 = por %p129, %p130
      %p132 = scmp.ne.s32.totalorder %s118, %s119
      %p133 = scmp.eq.s32.totalorder %s34, 5
      %p134 = por %p132, %p133
      %p136 = scmp.ne.s32.totalorder %s119, %s135
      %p137 = scmp.eq.s32.totalorder %s34, 0
      %p138 = por %p136, %p137
      %s139 = ssub.s32 %s36, %s50
      %p140 = scmp.eq.s32.totalorder %s139, 0
      %s142 = sadd.s32 %s141, 1
      %s143 = scalar_select %p140, %s141, %s142
      %p146 = pneg %p140
      %p147 = scmp.eq.s32.totalorder %s28, 5
      %p148 = por %p146, %p147
      %p149 = scmp.ne.s32.totalorder %s141, %s144
      %p150 = scmp.eq.s32.totalorder %s28, 0
      %p151 = por %p149, %p150
      %p152 = scmp.ne.s32.totalorder %s141, %s144
      %p153 = scmp.eq.s32.totalorder %s33, 5
      %p154 = por %p152, %p153
      %p155 = scmp.ne.s32.totalorder %s144, %s145
      %p156 = scmp.eq.s32.totalorder %s33, 0
      %p157 = por %p155, %p156
      %p158 = scmp.ne.s32.totalorder %s144, %s145
      %p159 = scmp.eq.s32.totalorder %s34, 5
      %p160 = por %p158, %p159
      %p162 = scmp.ne.s32.totalorder %s145, %s161
      %p163 = scmp.eq.s32.totalorder %s34, 0
      %p164 = por %p162, %p163
      %s165 = ssub.s32 %s36, %s50
      %p166 = scmp.eq.s32.totalorder %s165, 0
      %s168 = sadd.s32 %s167, 1
      %s169 = scalar_select %p166, %s167, %s168
      %p172 = pneg %p166
      %p173 = scmp.eq.s32.totalorder %s28, 5
      %p174 = por %p172, %p173
      %p175 = scmp.ne.s32.totalorder %s167, %s170
      %p176 = scmp.eq.s32.totalorder %s28, 0
      %p177 = por %p175, %p176
      %p178 = scmp.ne.s32.totalorder %s167, %s170
      %p179 = scmp.eq.s32.totalorder %s33, 5
      %p180 = por %p178, %p179
      %p181 = scmp.ne.s32.totalorder %s170, %s171
      %p182 = scmp.eq.s32.totalorder %s33, 0
      %p183 = por %p181, %p182
      %p184 = scmp.ne.s32.totalorder %s170, %s171
      %p185 = scmp.eq.s32.totalorder %s34, 5
      %p186 = por %p184, %p185
      %p188 = scmp.ne.s32.totalorder %s171, %s187
      %p189 = scmp.eq.s32.totalorder %s34, 0
      %p190 = por %p188, %p189
      %s191 = ssub.s32 %s35, %s54
      %s192 = ssub.s32 %s36, %s50
      %s193 = sor.u32 %s191, %s192
      %p194 = scmp.eq.s32.totalorder %s193, 0
      %s196 = sadd.s32 %s195, 1
      %s197 = scalar_select %p194, %s195, %s196
      %p200 = pneg %p194
      %p201 = scmp.eq.s32.totalorder %s28, 5
      %p202 = por %p200, %p201
      %p203 = scmp.ne.s32.totalorder %s195, %s198
      %p204 = scmp.eq.s32.totalorder %s28, 0
      %p205 = por %p203, %p204
      %p206 = scmp.ne.s32.totalorder %s195, %s198
      %p207 = scmp.eq.s32.totalorder %s33, 5
      %p208 = por %p206, %p207
      %p209 = scmp.ne.s32.totalorder %s198, %s199
      %p210 = scmp.eq.s32.totalorder %s33, 0
      %p211 = por %p209, %p210
      %p212 = scmp.ne.s32.totalorder %s198, %s199
      %p213 = scmp.eq.s32.totalorder %s34, 5
      %p214 = por %p212, %p213
      %p216 = scmp.ne.s32.totalorder %s199, %s215
      %p217 = scmp.eq.s32.totalorder %s34, 0
      %p218 = por %p216, %p217
      %s219 = ssub.s32 %s35, %s54
      %s220 = ssub.s32 %s36, %s50
      %s221 = sor.u32 %s219, %s220
      %p222 = scmp.eq.s32.totalorder %s221, 0
      %s224 = sadd.s32 %s223, 1
      %s225 = scalar_select %p222, %s223, %s224
      %p228 = pneg %p222
      %p229 = scmp.eq.s32.totalorder %s28, 5
      %p230 = por %p228, %p229
      %p231 = scmp.ne.s32.totalorder %s223, %s226
      %p232 = scmp.eq.s32.totalorder %s28, 0
      %p233 = por %p231, %p232
      %p234 = scmp.ne.s32.totalorder %s223, %s226
      %p235 = scmp.eq.s32.totalorder %s33, 5
      %p236 = por %p234, %p235
      %p237 = scmp.ne.s32.totalorder %s226, %s227
      %p238 = scmp.eq.s32.totalorder %s33, 0
      %p239 = por %p237, %p238
      %p240 = scmp.ne.s32.totalorder %s226, %s227
      %p241 = scmp.eq.s32.totalorder %s34, 5
      %p242 = por %p240, %p241
      %p244 = scmp.ne.s32.totalorder %s227, %s243
      %p245 = scmp.eq.s32.totalorder %s34, 0
      %p246 = por %p244, %p245
      %p247 = scmp.le.s32.totalorder 1, %s28
      %p248 = scmp.lt.s32.totalorder %s28, 7
      %p249 = pnand %p247, %p248
      %p250 = pneg %p249
      // Predicated region
      $region9: #{tpu_custom_call.1} parent=5 // pred_check
        _
      $region10: #{tpu_custom_call.1} parent=5 // pred_check_branch
        %252 = sbr.rel (%p249) target = $region12
      $region11: #{tpu_custom_call.1} parent=5 // pred_region
        %s253 = ssub.s32 %s28, 1
      $region12: #{tpu_custom_call.1} parent=5 // pred_fallthru
        _
      %p254 = scmp.lt.s32.totalorder %s28, 6
      // Predicated region
      $region13: #{tpu_custom_call.1} parent=5 // pred_check
        %p255 = pneg %p254
      $region14: #{tpu_custom_call.1} parent=5 // pred_check_branch
        %257 = sbr.rel (%p255) target = $region16
      $region15: #{tpu_custom_call.1} parent=5 // pred_region
        // Predicated region
        $region17: #{tpu_custom_call.1} parent=15 // pred_check
          %p258 = pneg %p69
        $region18: #{tpu_custom_call.1} parent=15 // pred_check_branch
          %260 = sbr.rel (%p258) target = $region20
        $region19: #{tpu_custom_call.1} parent=15 // pred_region
          %s261 = sand.u32 %s59, 1
          %s262 = scalar_lea.sflag [#allocation5], %s261
          %s263 = sand.u32 %s59, 1
          %s264 = smul.addr %s263, 8
          %s265 = scalar_lea.vmem [#allocation4], %s264
          %s266 = smul.u32 2, %s35
          %268 = vsyncadd %s262, 0
          %s269 = smul.addr %s266, 2
          %s270 = sadd.s32 %s37, %s269
          %s271 = smul.addr %s270, 4
          %s272 = scalar_lea.hbm %s0, %s271
          %s273 = sshll.u32 %s272, 4
          %s274 = int_to_ptr.hbm [resolvable:$true] %s273
          %s275 = sshll.u32 %s265, 4
          %s276 = int_to_ptr.vmem [resolvable:$true] %s275
          %281 = dma.hbm_to_vmem [thread:$0]  %s274, 128, %s276, %s262, 128, 64, 4
        $region20: #{tpu_custom_call.1} parent=15 // pred_fallthru
          _
        // Predicated region
        $region21: #{tpu_custom_call.1} parent=15 // pred_check
          %p282 = pneg %p97
        $region22: #{tpu_custom_call.1} parent=15 // pred_check_branch
          %284 = sbr.rel (%p282) target = $region24
        $region23: #{tpu_custom_call.1} parent=15 // pred_region
          %s285 = sand.u32 %s28, 1
          %s286 = scalar_lea.sflag [#allocation8], %s285
          %s287 = sand.u32 %s87, 1
          %s288 = smul.addr %s287, 8
          %s289 = scalar_lea.vmem [#allocation7], %s288
          %s290 = smul.u32 2, %s35
          %292 = vsyncadd %s286, 0
          %s293 = smul.addr %s290, 2
          %s294 = sadd.s32 %s37, %s293
          %s295 = smul.addr %s294, 4
          %s296 = scalar_lea.hbm %s1, %s295
          %s297 = sshll.u32 %s296, 4
          %s298 = int_to_ptr.hbm [resolvable:$true] %s297
          %s299 = sshll.u32 %s289, 4
          %s300 = int_to_ptr.vmem [resolvable:$true] %s299
          %305 = dma.hbm_to_vmem [thread:$0]  %s298, 128, %s300, %s286, 128, 64, 4
        $region24: #{tpu_custom_call.1} parent=15 // pred_fallthru
          _
        // Predicated region
        $region25: #{tpu_custom_call.1} parent=15 // pred_check
          %p306 = pneg %p125
        $region26: #{tpu_custom_call.1} parent=15 // pred_check_branch
          %308 = sbr.rel (%p306) target = $region28
        $region27: #{tpu_custom_call.1} parent=15 // pred_region
          %s309 = sand.u32 %s28, 1
          %s310 = scalar_lea.sflag [#allocation8], %s309
          %s311 = sand.u32 %s115, 1
          %s312 = smul.addr %s311, 64
          %s313 = scalar_lea.vmem [#allocation9], %s312
          %s314 = smul.u32 16, %s37
          %316 = vsyncadd %s310, 0
          %s317 = smul.addr %s314, 3
          %s318 = sadd.s32 %s36, %s317
          %s319 = smul.addr %s318, 4
          %s320 = scalar_lea.hbm %s2, %s319
          %s321 = sshll.u32 %s320, 4
          %s322 = int_to_ptr.hbm [resolvable:$true] %s321
          %s323 = sshll.u32 %s313, 4
          %s324 = int_to_ptr.vmem [resolvable:$true] %s323
          %329 = dma.hbm_to_vmem [thread:$0]  %s322, 1024, %s324, %s310, 192, 64, 4
        $region28: #{tpu_custom_call.1} parent=15 // pred_fallthru
          _
        // Predicated region
        $region29: #{tpu_custom_call.1} parent=15 // pred_check
          %p330 = pneg %p151
        $region30: #{tpu_custom_call.1} parent=15 // pred_check_branch
          %332 = sbr.rel (%p330) target = $region32
        $region31: #{tpu_custom_call.1} parent=15 // pred_region
          %s333 = sand.u32 %s141, 1
          %s334 = scalar_lea.sflag [#allocation11], %s333
          %s335 = sand.u32 %s141, 1
          %s336 = scalar_lea.vmem [#allocation10], %s335
          %338 = vsyncadd %s334, 0
          %s339 = scalar_lea.hbm %s3, %s36
          %s341 = sshll.u32 %s339, 4
          %s342 = int_to_ptr.hbm [resolvable:$true] %s341
          %s343 = sshll.u32 %s336, 4
          %s344 = int_to_ptr.vmem [resolvable:$true] %s343
          %346 = dma.hbm_to_vmem [thread:$0]  %s342, 16, %s344, %s334
        $region32: #{tpu_custom_call.1} parent=15 // pred_fallthru
          _
        // Predicated region
        $region33: #{tpu_custom_call.1} parent=15 // pred_check
          %p347 = pneg %p177
        $region34: #{tpu_custom_call.1} parent=15 // pred_check_branch
          %349 = sbr.rel (%p347) target = $region36
        $region35: #{tpu_custom_call.1} parent=15 // pred_region
          %p350 = scmp.lt.s32.totalorder %s36, 2
          %s351 = scalar_select %p350, %s36, 2
          %s352 = scalar_lea.vmem %s4, %s351
        $region36: #{tpu_custom_call.1} parent=15 // pred_fallthru
          _
      $region16: #{tpu_custom_call.1} parent=5 // pred_fallthru
        _
      %p353 = scmp.le.s32.totalorder 1, %s28
      %p354 = scmp.lt.s32.totalorder %s28, 7
      %p355 = pnand %p353, %p354
      %p356 = pneg %p355
      // Predicated region
      $region37: #{tpu_custom_call.1} parent=5 // pred_check
        _
      $region38: #{tpu_custom_call.1} parent=5 // pred_check_branch
        %358 = sbr.rel (%p355) target = $region40
      $region39: #{tpu_custom_call.1} parent=5 // pred_region
        %s359 = ssub.s32 %s28, 1
        %s360 = sand.u32 %s62, 1
        %s361 = scalar_lea.sflag [#allocation5], %s360
        %s362 = sand.u32 %s62, 1
        %s363 = smul.addr %s362, 8
        %s364 = scalar_lea.vmem [#allocation4], %s363
        // Predicated region
        $region41: #{tpu_custom_call.1} parent=39 // pred_check
          %p365 = pneg %p75
        $region42: #{tpu_custom_call.1} parent=39 // pred_check_branch
          %367 = sbr.rel (%p365) target = $region44
        $region43: #{tpu_custom_call.1} parent=39 // pred_region
          %369 = dma.done %s361, 128
        $region44: #{tpu_custom_call.1} parent=39 // pred_fallthru
          _
        %s370 = sand.u32 %s33, 1
        %s371 = scalar_lea.sflag [#allocation8], %s370
        %s372 = sand.u32 %s90, 1
        %s373 = smul.addr %s372, 8
        %s374 = scalar_lea.vmem [#allocation7], %s373
        // Predicated region
        $region45: #{tpu_custom_call.1} parent=39 // pred_check
          %p375 = pneg %p103
        $region46: #{tpu_custom_call.1} parent=39 // pred_check_branch
          %377 = sbr.rel (%p375) target = $region48
        $region47: #{tpu_custom_call.1} parent=39 // pred_region
          %379 = dma.done %s371, 128
        $region48: #{tpu_custom_call.1} parent=39 // pred_fallthru
          _
        %s380 = sand.u32 %s33, 1
        %s381 = scalar_lea.sflag [#allocation8], %s380
        %s382 = sand.u32 %s118, 1
        %s383 = smul.addr %s382, 64
        %s384 = scalar_lea.vmem [#allocation9], %s383
        // Predicated region
        $region49: #{tpu_custom_call.1} parent=39 // pred_check
          %p385 = pneg %p131
        $region50: #{tpu_custom_call.1} parent=39 // pred_check_branch
          %387 = sbr.rel (%p385) target = $region52
        $region51: #{tpu_custom_call.1} parent=39 // pred_region
          %389 = dma.done %s381, 1024
        $region52: #{tpu_custom_call.1} parent=39 // pred_fallthru
          _
        %s390 = sand.u32 %s144, 1
        %s391 = scalar_lea.sflag [#allocation11], %s390
        %s392 = sand.u32 %s144, 1
        %s393 = scalar_lea.vmem [#allocation10], %s392
        // Predicated region
        $region53: #{tpu_custom_call.1} parent=39 // pred_check
          %p394 = pneg %p157
        $region54: #{tpu_custom_call.1} parent=39 // pred_check_branch
          %396 = sbr.rel (%p394) target = $region56
        $region55: #{tpu_custom_call.1} parent=39 // pred_region
          %398 = dma.done %s391, 16
        $region56: #{tpu_custom_call.1} parent=39 // pred_fallthru
          _
        %s399 = sand.u32 %s62, 1
        %s400 = scalar_lea.sflag [#allocation5], %s399
        %s401 = sand.u32 %s62, 1
        %s402 = smul.addr %s401, 8
        %s403 = scalar_lea.vmem [#allocation4], %s402
        %p404 = pneg %p75
        %p405 = pneg %p72
        %s406 = sand.u32 %s33, 1
        %s407 = scalar_lea.sflag [#allocation8], %s406
        %s408 = sand.u32 %s90, 1
        %s409 = smul.addr %s408, 8
        %s410 = scalar_lea.vmem [#allocation7], %s409
        %p411 = pneg %p103
        %p412 = pneg %p100
        %s413 = sand.u32 %s33, 1
        %s414 = scalar_lea.sflag [#allocation8], %s413
        %s415 = sand.u32 %s118, 1
        %s416 = smul.addr %s415, 64
        %s417 = scalar_lea.vmem [#allocation9], %s416
        %p418 = pneg %p131
        %p419 = pneg %p128
        %s420 = sand.u32 %s144, 1
        %s421 = scalar_lea.sflag [#allocation11], %s420
        %s422 = sand.u32 %s144, 1
        %s423 = scalar_lea.vmem [#allocation10], %s422
        %p424 = pneg %p157
        %p425 = pneg %p154
        %p426 = scmp.lt.s32.totalorder %s39, 2
        %s427 = scalar_select %p426, %s39, 2
        %s428 = scalar_lea.vmem %s4, %s427
        %p429 = pneg %p183
        %p430 = pneg %p180
        %p431 = pneg %p211
        %p432 = pneg %p208
        %s433 = sand.u32 %s198, 1
        %s434 = scalar_lea.sflag [#allocation6], %s433
        %s435 = sand.u32 %s198, 1
        %s436 = smul.addr %s435, 16
        %s437 = scalar_lea.vmem [#allocation12], %s436
        %p438 = pneg %p239
        %p439 = pneg %p236
        %s440 = sand.u32 %s226, 1
        %s441 = scalar_lea.sflag [#allocation14], %s440
        %s442 = sand.u32 %s226, 1
        %s443 = smul.addr %s442, 16
        %s444 = scalar_lea.vmem [#allocation13], %s443
        %s445 = smul.u32 2, %s38
        %s446 = smul.u32 2, %s38
        %s447 = smul.u32 16, %s40
        %p448 = scmp.lt.s32.totalorder %s39, 2
        %s449 = scalar_select %p448, %s39, 2
        %s450 = scalar_lea.vmem %s4, %s449
        %s451 = smul.u32 2, %s38
        %s452 = smul.u32 2, %s38
        %v453 = vld [vmem:[%s364] sm:$0xf]
        %v454 = vld [vmem:[%s364 + $0x4] sm:$0xf]
        %v455 = vld [vmem:[%s374] sm:$0xf]
        %v456 = vld [vmem:[%s374 + $0x4] sm:$0xf]
        %v457 = vld [vmem:[%s384] sm:$0xf]
        %v458 = vld [vmem:[%s384 + $0x4] sm:$0xf]
        %v459 = vld [vmem:[%s384 + $0x8] sm:$0xf]
        %v460 = vld [vmem:[%s384 + $0xc] sm:$0xf]
        %v461 = vld [vmem:[%s384 + $0x10] sm:$0xf]
        %v462 = vld [vmem:[%s384 + $0x14] sm:$0xf]
        %v463 = vld [vmem:[%s384 + $0x18] sm:$0xf]
        %v464 = vld [vmem:[%s384 + $0x1c] sm:$0xf]
        %v465 = vld [vmem:[%s384 + $0x20] sm:$0xf]
        %v466 = vld [vmem:[%s384 + $0x24] sm:$0xf]
        %v467 = vld [vmem:[%s384 + $0x28] sm:$0xf]
        %v468 = vld [vmem:[%s384 + $0x2c] sm:$0xf]
        %v469 = vld [vmem:[%s384 + $0x30] sm:$0xf]
        %v470 = vld [vmem:[%s384 + $0x34] sm:$0xf]
        %v471 = vld [vmem:[%s384 + $0x38] sm:$0xf]
        %v472 = vld [vmem:[%s384 + $0x3c] sm:$0xf]
        %v473 = vunpack.c.l.bf16 %v455
        %v474 = vunpack.c.l.bf16 %v456
        %v475 = vmul.f32 %v473, %v473
        %v476 = vmul.f32 %v474, %v474
        %v477 = vpack.c.bf16 %v476, %v475
        %v478 = vunpack.c.l.bf16 %v457
        %v479 = vunpack.c.l.bf16 %v458
        %v480 = vunpack.c.l.bf16 %v459
        %v481 = vunpack.c.l.bf16 %v460
        %v482 = vunpack.c.l.bf16 %v461
        %v483 = vunpack.c.l.bf16 %v462
        %v484 = vunpack.c.l.bf16 %v463
        %v485 = vunpack.c.l.bf16 %v464
        %v486 = vunpack.c.l.bf16 %v465
        %v487 = vunpack.c.l.bf16 %v466
        %v488 = vunpack.c.l.bf16 %v467
        %v489 = vunpack.c.l.bf16 %v468
        %v490 = vunpack.c.l.bf16 %v469
        %v491 = vunpack.c.l.bf16 %v470
        %v492 = vunpack.c.l.bf16 %v471
        %v493 = vunpack.c.l.bf16 %v472
        %v494 = vmul.f32 %v478, %v478
        %v495 = vmul.f32 %v479, %v479
        %v496 = vmul.f32 %v480, %v480
        %v497 = vmul.f32 %v481, %v481
        %v498 = vmul.f32 %v482, %v482
        %v499 = vmul.f32 %v483, %v483
        %v500 = vmul.f32 %v484, %v484
        %v501 = vmul.f32 %v485, %v485
        %v502 = vmul.f32 %v486, %v486
        %v503 = vmul.f32 %v487, %v487
        %v504 = vmul.f32 %v488, %v488
        %v505 = vmul.f32 %v489, %v489
        %v506 = vmul.f32 %v490, %v490
        %v507 = vmul.f32 %v491, %v491
        %v508 = vmul.f32 %v492, %v492
        %v509 = vmul.f32 %v493, %v493
        %v510 = vpack.c.bf16 %v495, %v494
        %v511 = vpack.c.bf16 %v497, %v496
        %v512 = vpack.c.bf16 %v499, %v498
        %v513 = vpack.c.bf16 %v501, %v500
        %v514 = vpack.c.bf16 %v503, %v502
        %v515 = vpack.c.bf16 %v505, %v504
        %v516 = vpack.c.bf16 %v507, %v506
        %v517 = vpack.c.bf16 %v509, %v508
        %v520 = vunpack.c.l.b16 %v453
        %v521 = vunpack.c.l.b16 %v454
        %v522 = vpack.c.b16 %v521, %v520
        %v540 = vunpack.c.l.b16 %v457
        %v541 = vunpack.c.l.b16 %v458
        %v542 = vunpack.c.l.b16 %v459
        %v543 = vunpack.c.l.b16 %v460
        %v544 = vunpack.c.l.b16 %v461
        %v545 = vunpack.c.l.b16 %v462
        %v546 = vunpack.c.l.b16 %v463
        %v547 = vunpack.c.l.b16 %v464
        %v548 = vunpack.c.l.b16 %v465
        %v549 = vunpack.c.l.b16 %v466
        %v550 = vunpack.c.l.b16 %v467
        %v551 = vunpack.c.l.b16 %v468
        %v552 = vunpack.c.l.b16 %v469
        %v553 = vunpack.c.l.b16 %v470
        %v554 = vunpack.c.l.b16 %v471
        %v555 = vunpack.c.l.b16 %v472
        %v556 = vpack.c.b16 %v541, %v540
        %v557 = vpack.c.b16 %v543, %v542
        %v558 = vpack.c.b16 %v545, %v544
        %v559 = vpack.c.b16 %v547, %v546
        %v560 = vpack.c.b16 %v549, %v548
        %v561 = vpack.c.b16 %v551, %v550
        %v562 = vpack.c.b16 %v553, %v552
        %v563 = vpack.c.b16 %v555, %v554
        %572 = vmatpush.bf16.msra.mxu0 %v563
        %573 = vmatpush.bf16.msra.mxu0 %v562
        %574 = vmatpush.bf16.msra.mxu0 %v561
        %575 = vmatpush.bf16.msra.mxu0 %v560
        %576 = vmatpush.bf16.msra.mxu0 %v559
        %577 = vmatpush.bf16.msra.mxu0 %v558
        %578 = vmatpush.bf16.msra.mxu0 %v557
        %579 = vmatpush.bf16.msra.mxu0 %v556
        %580 = vmatmul.bf16.gmra.mxu0 %v522
        %v581 = vpop.f32.mrf.mxu0
        %v582 = vadd.f32 0.0, %v581
        %v583 = vpop.f32.mrf.mxu0
        %v584 = vadd.f32 0.0, %v583
        %585 = vdwg.mxu0
        %586 = vmatpush.bf16.msra.mxu0 %v517
        %587 = vmatpush.bf16.msra.mxu0 %v516
        %588 = vmatpush.bf16.msra.mxu0 %v515
        %589 = vmatpush.bf16.msra.mxu0 %v514
        %590 = vmatpush.bf16.msra.mxu0 %v513
        %591 = vmatpush.bf16.msra.mxu0 %v512
        %592 = vmatpush.bf16.msra.mxu0 %v511
        %593 = vmatpush.bf16.msra.mxu0 %v510
        %594 = vmatmul.bf16.gmra.mxu0 %v477
        %v595 = vpop.f32.mrf.mxu0
        %v596 = vadd.f32 0.0, %v595
        %v597 = vpop.f32.mrf.mxu0
        %v598 = vadd.f32 0.0, %v597
        %599 = vdwg.mxu0
        %p600 = scmp.eq.s32.totalorder %s40, 0
        // Predicated region
        $region57: #{tpu_custom_call.1} parent=39 // pred_check
          %p601 = pneg %p600
        $region58: #{tpu_custom_call.1} parent=39 // pred_check_branch
          %603 = sbr.rel (%p601) target = $region60
        $region59: #{tpu_custom_call.1} parent=39 // pred_region
          %604 = vst [vmem:[#allocation2] sm:$0xff] %v582
          %605 = vst [vmem:[#allocation2 + $0x8] sm:$0xff] %v584
          %606 = vst [vmem:[#allocation3] sm:$0xff] %v596
          %607 = vst [vmem:[#allocation3 + $0x8] sm:$0xff] %v598
        $region60: #{tpu_custom_call.1} parent=39 // pred_fallthru
          _
        %p608 = scmp.gt.s32.totalorder %s40, 0
        // Predicated region
        $region61: #{tpu_custom_call.1} parent=39 // pred_check
          %p609 = pneg %p608
        $region62: #{tpu_custom_call.1} parent=39 // pred_check_branch
          %611 = sbr.rel (%p609) target = $region64
        $region63: #{tpu_custom_call.1} parent=39 // pred_region
          %v612 = vld [vmem:[#allocation2] sm:$0xff]
          %v613 = vld [vmem:[#allocation2 + $0x8] sm:$0xff]
          %v614 = vadd.f32 %v612, %v582
          %v615 = vadd.f32 %v613, %v584
          %616 = vst [vmem:[#allocation2] sm:$0xff] %v614
          %617 = vst [vmem:[#allocation2 + $0x8] sm:$0xff] %v615
          %v618 = vld [vmem:[#allocation3] sm:$0xff]
          %v619 = vld [vmem:[#allocation3 + $0x8] sm:$0xff]
          %v620 = vadd.f32 %v618, %v596
          %v621 = vadd.f32 %v619, %v598
          %622 = vst [vmem:[#allocation3] sm:$0xff] %v620
          %623 = vst [vmem:[#allocation3 + $0x8] sm:$0xff] %v621
        $region64: #{tpu_custom_call.1} parent=39 // pred_fallthru
          _
        %p624 = scmp.eq.s32.totalorder %s40, 1
        // Predicated region
        $region65: #{tpu_custom_call.1} parent=39 // pred_check
          %p625 = pneg %p624
        $region66: #{tpu_custom_call.1} parent=39 // pred_check_branch
          %627 = sbr.rel (%p625) target = $region68
        $region67: #{tpu_custom_call.1} parent=39 // pred_region
          %v628 = vld [vmem:[#allocation2] sm:$0xff]
          %v629 = vld [vmem:[#allocation2 + $0x8] sm:$0xff]
          %v630 = vld [vmem:[%s393] sm:$0x1]
          %v632 = vperm.slane %v630, 0
          %v634 = vadd.f32 %v628, %v632
          %v635 = vadd.f32 %v629, %v632
          %636 = vst [vmem:[%s437] sm:$0xff] %v634
          %637 = vst [vmem:[%s437 + $0x8] sm:$0xff] %v635
          %v638 = vld [vmem:[#allocation3] sm:$0xff]
          %v639 = vld [vmem:[#allocation3 + $0x8] sm:$0xff]
          %v640 = vld [vmem:[%s450] sm:$0x1]
          %v642 = vperm.slane %v640, 0
          %v644 = vadd.f32 %v638, %v642
          %v645 = vadd.f32 %v639, %v642
          %v646 = vrsqrt.pop %v644
          %v647 = vmul.f32 %v646, %v644
          %v648 = vmul.f32 %v647, %v646
          %v649 = vmul.f32 0.5, %v648
          %v650 = vsub.f32 1.5, %v649
          %v651 = vmul.f32 %v646, %v650
          %v652 = vmul.f32 %v644, %v651
          %vm653 = vcmp.eq.f32.partialorder %v644, inf
          %v654 = vsel %vm653, %v644, %v652
          %vm655 = vcmp.eq.f32.partialorder %v644, 0.0
          %v656 = vand.u32 %v644, 2147483648
          %v657 = vsel %vm655, %v656, %v654
          %v658 = vrsqrt.pop %v645
          %v659 = vmul.f32 %v658, %v645
          %v660 = vmul.f32 %v659, %v658
          %v661 = vmul.f32 0.5, %v660
          %v662 = vsub.f32 1.5, %v661
          %v663 = vmul.f32 %v658, %v662
          %v664 = vmul.f32 %v645, %v663
          %vm665 = vcmp.eq.f32.partialorder %v645, inf
          %v666 = vsel %vm665, %v645, %v664
          %vm667 = vcmp.eq.f32.partialorder %v645, 0.0
          %v668 = vand.u32 %v645, 2147483648
          %v669 = vsel %vm667, %v668, %v666
          %670 = vst [vmem:[%s444] sm:$0xff] %v657
          %671 = vst [vmem:[%s444 + $0x8] sm:$0xff] %v669
        $region68: #{tpu_custom_call.1} parent=39 // pred_fallthru
          _
        %s672 = sand.u32 %s198, 1
        %s673 = scalar_lea.sflag [#allocation6], %s672
        %s674 = sand.u32 %s198, 1
        %s675 = smul.addr %s674, 16
        %s676 = scalar_lea.vmem [#allocation12], %s675
        %s677 = sand.u32 %s226, 1
        %s678 = scalar_lea.sflag [#allocation14], %s677
        %s679 = sand.u32 %s226, 1
        %s680 = smul.addr %s679, 16
        %s681 = scalar_lea.vmem [#allocation13], %s680
        // Predicated region
        $region69: #{tpu_custom_call.1} parent=39 // pred_check
          %p682 = pneg %p208
        $region70: #{tpu_custom_call.1} parent=39 // pred_check_branch
          %684 = sbr.rel (%p682) target = $region72
        $region71: #{tpu_custom_call.1} parent=39 // pred_region
          %s685 = smul.u32 2, %s38
          %687 = vsyncadd %s673, 0
          %s688 = smul.addr %s685, 3
          %s689 = sadd.s32 %s39, %s688
          %s690 = smul.addr %s689, 8
          %s691 = scalar_lea.hbm %s5, %s690
          %s692 = sshll.u32 %s676, 4
          %s693 = int_to_ptr.vmem [resolvable:$true] %s692
          %s694 = sshll.u32 %s691, 4
          %s695 = int_to_ptr.hbm [resolvable:$true] %s694
          %700 = dma.vmem_to_hbm [thread:$0]  %s693, 256, %s695, %s673, 128, 384, 8
        $region72: #{tpu_custom_call.1} parent=39 // pred_fallthru
          _
        // Predicated region
        $region73: #{tpu_custom_call.1} parent=39 // pred_check
          %p701 = pneg %p236
        $region74: #{tpu_custom_call.1} parent=39 // pred_check_branch
          %703 = sbr.rel (%p701) target = $region76
        $region75: #{tpu_custom_call.1} parent=39 // pred_region
          %s704 = smul.u32 2, %s38
          %706 = vsyncadd %s678, 0
          %s707 = smul.addr %s704, 3
          %s708 = sadd.s32 %s39, %s707
          %s709 = smul.addr %s708, 8
          %s710 = scalar_lea.hbm %s6, %s709
          %s711 = sshll.u32 %s681, 4
          %s712 = int_to_ptr.vmem [resolvable:$true] %s711
          %s713 = sshll.u32 %s710, 4
          %s714 = int_to_ptr.hbm [resolvable:$true] %s713
          %719 = dma.vmem_to_hbm [thread:$0]  %s712, 256, %s714, %s678, 128, 384, 8
        $region76: #{tpu_custom_call.1} parent=39 // pred_fallthru
          _
      $region40: #{tpu_custom_call.1} parent=5 // pred_fallthru
        _
      %p720 = scmp.le.s32.totalorder 2, %s28
      // Predicated region
      $region77: #{tpu_custom_call.1} parent=5 // pred_check
        %p721 = pneg %p720
      $region78: #{tpu_custom_call.1} parent=5 // pred_check_branch
        %723 = sbr.rel (%p721) target = $region80
      $region79: #{tpu_custom_call.1} parent=5 // pred_region
        %s724 = ssub.s32 %s28, 2
        // Predicated region
        $region81: #{tpu_custom_call.1} parent=79 // pred_check
          %p725 = pneg %p214
        $region82: #{tpu_custom_call.1} parent=79 // pred_check_branch
          %727 = sbr.rel (%p725) target = $region84
        $region83: #{tpu_custom_call.1} parent=79 // pred_region
          %s728 = sand.u32 %s199, 1
          %s729 = scalar_lea.sflag [#allocation6], %s728
          %s730 = sand.u32 %s199, 1
          %s731 = smul.addr %s730, 16
          %s732 = scalar_lea.vmem [#allocation12], %s731
          %734 = dma.done %s729, 256
        $region84: #{tpu_custom_call.1} parent=79 // pred_fallthru
          _
        // Predicated region
        $region85: #{tpu_custom_call.1} parent=79 // pred_check
          %p735 = pneg %p242
        $region86: #{tpu_custom_call.1} parent=79 // pred_check_branch
          %737 = sbr.rel (%p735) target = $region88
        $region87: #{tpu_custom_call.1} parent=79 // pred_region
          %s738 = sand.u32 %s227, 1
          %s739 = scalar_lea.sflag [#allocation14], %s738
          %s740 = sand.u32 %s227, 1
          %s741 = smul.addr %s740, 16
          %s742 = scalar_lea.vmem [#allocation13], %s741
          %744 = dma.done %s739, 256
        $region88: #{tpu_custom_call.1} parent=79 // pred_fallthru
          _
      $region80: #{tpu_custom_call.1} parent=5 // pred_fallthru
        _
    $region6: #{tpu_custom_call.1} parent=1 // loop_footer
      %s32 = sadd.s32 1, %s28
    $region7: #{tpu_custom_call.1} parent=1 // loop_footer_branch
      %27 = sbr.rel target = $region3
    $region8: #{tpu_custom_call.1} parent=1 // loop_exit
      _
    %745 = vsyncpa [#allocation5], 1
    %s746 = scalar_lea.sflag [#allocation5], 1
    %747 = vsyncpa %s746, 1
    %748 = vsyncpa [#allocation8], 1
    %s749 = scalar_lea.sflag [#allocation8], 1
    %750 = vsyncpa %s749, 1
    %751 = vsyncpa [#allocation11], 1
    %s752 = scalar_lea.sflag [#allocation11], 1
    %753 = vsyncpa %s752, 1
    %754 = vsyncpa [#allocation6], 1
    %s755 = scalar_lea.sflag [#allocation6], 1
    %756 = vsyncpa %s755, 1
    %757 = vsyncpa [#allocation14], 1
    %s758 = scalar_lea.sflag [#allocation14], 1
    %759 = vsyncpa %s758, 1

</llo_original>
